<compile_context>
chip_gen: v7x
topology: tpu7x:2x2x1
jax: 0.10.0
libtpu: 0.0.40
codegen_flags: <defaults>
</compile_context>

<pallas_src>
import jax
import jax.numpy as jnp
import numpy as np
from jax.experimental import pallas as pl
from jax.experimental.pallas import tpu as pltpu

DEGREE = 3          # matches `degree = 3` in the reference script
LANES = 128
TILE_ROWS = 1024    # 1024x128 f32 = 512 KiB/block; ~2 MiB with in+out double-buffered
                    # -> fits the default scoped VMEM on v5e (16 MiB) / v6e / v7x (32 MiB)


def poly_kernel(w_ref, x_ref, o_ref):
    # Horner's rule: ((w3*x + w2)*x + w1)*x + w0
    #   == vander(x, DEGREE+1, increasing=True) @ w   (elementwise over the tile)
    w = [w_ref[k] for k in range(DEGREE + 1)]   # scalar SMEM reads, hoisted once
    x = x_ref[...]
    acc = x * w[DEGREE] + w[DEGREE - 1]         # no full-vreg splat needed
    for k in range(DEGREE - 2, -1, -1):
        acc = acc * x + w[k]
    o_ref[...] = acc


def _poly_pallas_2d(x2, weights):
    rows, lanes = x2.shape
    # Full-array block when rows < TILE_ROWS (always a legal block shape);
    # otherwise 1024-row blocks, ragged last block handled by Pallas edge masking.
    tile_rows = min(TILE_ROWS, rows)
    grid = (pl.cdiv(rows, tile_rows),)
    return pl.pallas_call(
        poly_kernel,
        out_shape=jax.ShapeDtypeStruct((rows, lanes), x2.dtype),
        grid=grid,
        in_specs=[
            pl.BlockSpec(memory_space=pltpu.MemorySpace.SMEM),      # weights (whole, SMEM)
            pl.BlockSpec((tile_rows, LANES), lambda i: (i, 0)),     # x tile (VMEM, pipelined)
        ],
        out_specs=pl.BlockSpec((tile_rows, LANES), lambda i: (i, 0)),
        compiler_params=pltpu.CompilerParams(
            # Elementwise + independent blocks: shard the row grid across both
            # TensorCores on v7x (no-op on single-TC v5e/v6e).
            dimension_semantics=("parallel",),
        ),
    )(weights, x2)


def polynomial_model(x, weights, *, use_pallas_min_n=0):
    """x: (N,) float32, weights: (DEGREE+1,) float32 -> (N,) float32."""
    n = x.shape[0]

    if n < use_pallas_min_n:
        # Tiny inputs: a pallas_call launch costs more than the work; let XLA fuse this.
        acc = jnp.full_like(x, weights[DEGREE])
        for k in range(DEGREE - 1, -1, -1):
            acc = acc * x + weights[k]
        return acc

    if n % LANES == 0:
        # Contiguous reshape: a metadata-only view, no extra HBM copy.
        out2 = _poly_pallas_2d(x.reshape(n // LANES, LANES), weights)
        return out2.reshape(n)

    # Ragged N: pad only up to the next multiple of 128 lanes (one small copy),
    # then slice the tail off.  Row raggedness inside the grid needs no padding.
    n_pad = ((n + LANES - 1) // LANES) * LANES
    x_padded = jnp.pad(x, (0, n_pad - n))
    out2 = _poly_pallas_2d(x_padded.reshape(n_pad // LANES, LANES), weights)
    return out2.reshape(n_pad)[:n]


def _reference(x, weights):
    # Pure-JAX reference: vander(x, DEGREE+1, increasing=True) @ weights
    powers = jnp.stack([x ** k for k in range(DEGREE + 1)], axis=1)  # (N, DEGREE+1)
    return powers @ weights


if __name__ == "__main__":
    key = jax.random.PRNGKey(0)
    # Deterministic parameter init, identical to nn.Parameter(torch.ones(degree + 1))
    weights = jnp.ones((DEGREE + 1,), dtype=jnp.float32)

    # Case 1: N divisible by 128 -> zero-copy reshape path, multi-step grid.
    n1 = 256 * 1024  # rows = 2048 -> grid of 2 blocks of 1024 rows
    x1 = jax.random.normal(key, (n1,), dtype=jnp.float32)
    out1 = jax.block_until_ready(polynomial_model(x1, weights))
    np.testing.assert_allclose(
        np.asarray(out1), np.asarray(_reference(x1, weights)), rtol=1e-5, atol=1e-5
    )

    # Case 2: ragged N -> lane-pad path + ragged last grid block.
    n2 = 2048 + 37
    x2 = jax.random.normal(jax.random.PRNGKey(1), (n2,), dtype=jnp.float32)
    out2 = jax.block_until_ready(polynomial_model(x2, weights))
    np.testing.assert_allclose(
        np.asarray(out2), np.asarray(_reference(x2, weights)), rtol=1e-5, atol=1e-5
    )

    print("KERNEL_OK")
</pallas_src>

<mosaic_0001>
module attributes {stable_mosaic.version = 11 : i64} {
  func.func @poly_kernel(%arg0: i32, %arg1: memref<4xf32, #tpu.memory_space<smem>>, %arg2: memref<1024x128xf32, #tpu.memory_space<vmem>>, %arg3: memref<1024x128xf32, #tpu.memory_space<vmem>>) attributes {dimension_semantics = [#tpu.dimension_semantics<parallel>], iteration_bounds = array<i64: 2>, scalar_prefetch = 0 : i64, scratch_operands = 0 : i64, tpu.core_type = #tpu.core_type<tc>, window_params = [{transform_indices = @transform_0, window_bounds = array<i64: 4>}, {transform_indices = @transform_1, window_bounds = array<i64: 1024, 128>}, {transform_indices = @transform_2, window_bounds = array<i64: 1024, 128>}]} {
    %c0 = arith.constant 0 : index
    %0 = memref.load %arg1[%c0] : memref<4xf32, #tpu.memory_space<smem>>
    %c1 = arith.constant 1 : index
    %1 = memref.load %arg1[%c1] : memref<4xf32, #tpu.memory_space<smem>>
    %c2 = arith.constant 2 : index
    %2 = memref.load %arg1[%c2] : memref<4xf32, #tpu.memory_space<smem>>
    %c3 = arith.constant 3 : index
    %3 = memref.load %arg1[%c3] : memref<4xf32, #tpu.memory_space<smem>>
    %c0_0 = arith.constant 0 : index
    %c0_1 = arith.constant 0 : index
    %4 = vector.load %arg2[%c0_0, %c0_1] : memref<1024x128xf32, #tpu.memory_space<vmem>>, vector<1024x128xf32>
    %5 = vector.broadcast %3 : f32 to vector<1024x128xf32>
    %6 = arith.mulf %4, %5 : vector<1024x128xf32>
    %7 = vector.broadcast %2 : f32 to vector<1024x128xf32>
    %8 = arith.addf %6, %7 : vector<1024x128xf32>
    %9 = arith.mulf %8, %4 : vector<1024x128xf32>
    %10 = vector.broadcast %1 : f32 to vector<1024x128xf32>
    %11 = arith.addf %9, %10 : vector<1024x128xf32>
    %12 = arith.mulf %11, %4 : vector<1024x128xf32>
    %13 = vector.broadcast %0 : f32 to vector<1024x128xf32>
    %14 = arith.addf %12, %13 : vector<1024x128xf32>
    %c0_2 = arith.constant 0 : index
    %c0_3 = arith.constant 0 : index
    %15 = vector.load %arg3[%c0_2, %c0_3] : memref<1024x128xf32, #tpu.memory_space<vmem>>, vector<1024x128xf32>
    tpu.vector_store %arg3[%c0_2, %c0_3], %14 {strides = array<i32>} : memref<1024x128xf32, #tpu.memory_space<vmem>>, vector<1024x128xf32>,
    return
  }
  func.func @transform_0(%arg0: i32) -> i32 {
    %c0_i32 = arith.constant 0 : i32
    %c0_i32_0 = arith.constant 0 : i32
    return %c0_i32 : i32
  }
  func.func @transform_1(%arg0: i32) -> (i32, i32) {
    %c0_i32 = arith.constant 0 : i32
    %c0_i32_0 = arith.constant 0 : i32
    return %arg0, %c0_i32 : i32, i32
  }
  func.func @transform_2(%arg0: i32) -> (i32, i32) {
    %c0_i32 = arith.constant 0 : i32
    %c0_i32_0 = arith.constant 0 : i32
    return %arg0, %c0_i32 : i32, i32
  }
}

</mosaic_0001>

<llo_original>
// kernel: tpu_custom_call.1
$region0: #{tpu_custom_call.1}
  #allocation0 [shape = 'u32[]', space=smem, size = 0x4, offset = 0x4, fixed_abs, tag = 'smem constant byte address 0x4 - core index']
  #allocation1 [shape = 'u32[144,128]{1,0:T(1,128)}', space=vmem, size = 0x12000, scoped, tag = 'internal scratch']
  %s0 = inlined_call_operand.hbm [shape: f32[4], index: 0, kind: input, shape index: {}]
  %s1 = inlined_call_operand.hbm [shape: f32[2048,128], index: 1, kind: input, shape index: {}]
  %s2 = inlined_call_operand.hbm [shape: f32[2048,128], index: 2, kind: output, shape index: {}]
  %s3 = sld [smem:[#allocation0]]
  $region49: #{tpu_custom_call.1} parent=0
    _
  %s5 = ssub.s32 1, %s3
  %s6 = scalar_select 0, %s5, %s3
  $region1: #{tpu_custom_call.1} parent=0
    #allocation2 [shape = 'u8[512]{0}', space=smem, size = 0x200, scoped, tag = 'input window, operand 0, single buffered']
    #allocation3 [shape = 's32[2]{0}', space=sflag, size = 0x8, scoped, tag = 'scoped memory for tpu_custom_call.1']
    #allocation4 [shape = 's32[2]{0}', space=sflag, size = 0x8, scoped, tag = 'scoped memory for tpu_custom_call.1']
    #allocation5 [shape = 's32[2]{0}', space=sflag, size = 0x8, scoped, tag = 'scoped memory for tpu_custom_call.1']
    #allocation6 [shape = 'u8[1048576]{0}', space=vmem, size = 0x100000, scoped, tag = 'input window, operand 1']
    #allocation7 [shape = 'u8[1048576]{0}', space=vmem, size = 0x100000, scoped, tag = 'output window, operand 0']
    %7 = vsyncpa [#allocation5], 0
    %8 = vsyncpa [#allocation3], 0
    %s9 = scalar_lea.sflag [#allocation3], 1
    %10 = vsyncpa %s9, 0
    %11 = vsyncpa [#allocation4], 0
    %s12 = scalar_lea.sflag [#allocation4], 1
    %13 = vsyncpa %s12, 0
    loop: start=0, step=1, limit=4
    $region2: #{tpu_custom_call.1} parent=1 // loop_pre_header
      _
    $region3: #{tpu_custom_call.1} parent=1 // loop_header
      %s15 = sphi 0, %s19
      %p16 = scmp.ge.s32.totalorder %s15, 4
      %s23 = sphi 0, %s23
      %s25 = sphi 0, %s23
      %s26 = sphi 0, %s25
      %s40 = sphi 0, %s26
      %s46 = sphi 0, %s48
      %s49 = sphi 0, %s46
      %s50 = sphi 0, %s49
      %s66 = sphi 0, %s50
      %s72 = sphi 0, %s74
      %s75 = sphi 0, %s72
      %s76 = sphi 0, %s75
      %s92 = sphi 0, %s76
    $region4: #{tpu_custom_call.1} parent=1 // loop_header_branch
      %18 = sbr.rel (%p16) target = $region8
    $region5: #{tpu_custom_call.1} parent=1 // loop_body
      %s20 = ssub.s32 %s15, 1
      %s21 = ssub.s32 %s15, 2
      %s22 = sadd.s32 %s15, 1
      %s24 = sadd.s32 %s23, 1
      %p27 = scmp.eq.s32.totalorder %s15, 1
      %p28 = scmp.ne.s32.totalorder %s23, %s25
      %p29 = scmp.eq.s32.totalorder %s15, 0
      %p30 = por %p28, %p29
      %p31 = scmp.ne.s32.totalorder %s23, %s25
      %p32 = scmp.eq.s32.totalorder %s20, 1
      %p33 = por %p31, %p32
      %p34 = scmp.ne.s32.totalorder %s25, %s26
      %p35 = scmp.eq.s32.totalorder %s20, 0
      %p36 = por %p34, %p35
      %p37 = scmp.ne.s32.totalorder %s25, %s26
      %p38 = scmp.eq.s32.totalorder %s21, 1
      %p39 = por %p37, %p38
      %p41 = scmp.ne.s32.totalorder %s26, %s40
      %p42 = scmp.eq.s32.totalorder %s21, 0
      %p43 = por %p41, %p42
      %s44 = ssub.s32 %s15, %s22
      %p45 = scmp.eq.s32.totalorder %s44, 0
      %s47 = sadd.s32 %s46, 1
      %s48 = scalar_select %p45, %s46, %s47
      %p51 = pneg %p45
      %p52 = scmp.eq.s32.totalorder %s15, 1
      %p53 = por %p51, %p52
      %p54 = scmp.ne.s32.totalorder %s46, %s49
      %p55 = scmp.eq.s32.totalorder %s15, 0
      %p56 = por %p54, %p55
      %p57 = scmp.ne.s32.totalorder %s46, %s49
      %p58 = scmp.eq.s32.totalorder %s20, 1
      %p59 = por %p57, %p58
      %p60 = scmp.ne.s32.totalorder %s49, %s50
      %p61 = scmp.eq.s32.totalorder %s20, 0
      %p62 = por %p60, %p61
      %p63 = scmp.ne.s32.totalorder %s49, %s50
      %p64 = scmp.eq.s32.totalorder %s21, 1
      %p65 = por %p63, %p64
      %p67 = scmp.ne.s32.totalorder %s50, %s66
      %p68 = scmp.eq.s32.totalorder %s21, 0
      %p69 = por %p67, %p68
      %s70 = ssub.s32 %s15, %s22
      %p71 = scmp.eq.s32.totalorder %s70, 0
      %s73 = sadd.s32 %s72, 1
      %s74 = scalar_select %p71, %s72, %s73
      %p77 = pneg %p71
      %p78 = scmp.eq.s32.totalorder %s15, 1
      %p79 = por %p77, %p78
      %p80 = scmp.ne.s32.totalorder %s72, %s75
      %p81 = scmp.eq.s32.totalorder %s15, 0
      %p82 = por %p80, %p81
      %p83 = scmp.ne.s32.totalorder %s72, %s75
      %p84 = scmp.eq.s32.totalorder %s20, 1
      %p85 = por %p83, %p84
      %p86 = scmp.ne.s32.totalorder %s75, %s76
      %p87 = scmp.eq.s32.totalorder %s20, 0
      %p88 = por %p86, %p87
      %p89 = scmp.ne.s32.totalorder %s75, %s76
      %p90 = scmp.eq.s32.totalorder %s21, 1
      %p91 = por %p89, %p90
      %p93 = scmp.ne.s32.totalorder %s76, %s92
      %p94 = scmp.eq.s32.totalorder %s21, 0
      %p95 = por %p93, %p94
      %p96 = scmp.le.s32.totalorder 1, %s15
      %p97 = scmp.lt.s32.totalorder %s15, 3
      %p98 = pnand %p96, %p97
      %p99 = pneg %p98
      // Predicated region
      $region9: #{tpu_custom_call.1} parent=5 // pred_check
        _
      $region10: #{tpu_custom_call.1} parent=5 // pred_check_branch
        %101 = sbr.rel (%p98) target = $region12
      $region11: #{tpu_custom_call.1} parent=5 // pred_region
        %s102 = ssub.s32 %s15, 1
        // Predicated region
        $region13: #{tpu_custom_call.1} parent=11 // pred_check
          %p103 = pneg %p36
        $region14: #{tpu_custom_call.1} parent=11 // pred_check_branch
          %105 = sbr.rel (%p103) target = $region16
        $region15: #{tpu_custom_call.1} parent=11 // pred_region
          %s107 = ssub.s32 16, 16
          %108 = vsyncadd [#allocation5], %s107
          %111 = dma.hbm_to_smem %s0, 16, [#allocation2], [#allocation5]
        $region16: #{tpu_custom_call.1} parent=11 // pred_fallthru
          _
      $region12: #{tpu_custom_call.1} parent=5 // pred_fallthru
        _
      %p112 = scmp.lt.s32.totalorder %s15, 2
      // Predicated region
      $region17: #{tpu_custom_call.1} parent=5 // pred_check
        %p113 = pneg %p112
      $region18: #{tpu_custom_call.1} parent=5 // pred_check_branch
        %115 = sbr.rel (%p113) target = $region20
      $region19: #{tpu_custom_call.1} parent=5 // pred_region
        // Predicated region
        $region21: #{tpu_custom_call.1} parent=19 // pred_check
          %p116 = pneg %p56
        $region22: #{tpu_custom_call.1} parent=19 // pred_check_branch
          %118 = sbr.rel (%p116) target = $region24
        $region23: #{tpu_custom_call.1} parent=19 // pred_region
          %s119 = sand.u32 %s46, 1
          %s120 = scalar_lea.sflag [#allocation3], %s119
          %s121 = sand.u32 %s46, 1
          %s122 = smul.addr %s121, 1024
          %s123 = scalar_lea.vmem [#allocation6], %s122
          %s124 = smul.u32 128, %s15
          %s126 = ssub.s32 16384, 16384
          %127 = vsyncadd %s120, %s126
          %s128 = smul.addr %s124, 128
          %s129 = scalar_lea.hbm %s1, %s128
          %s130 = sshll.u32 %s123, 4
          %s131 = int_to_ptr.vmem [resolvable:$true] %s130
          %136 = dma.hbm_to_vmem [thread:$0]  %s129, 16384, %s131, %s120, 128, 128, 8
        $region24: #{tpu_custom_call.1} parent=19 // pred_fallthru
          _
      $region20: #{tpu_custom_call.1} parent=5 // pred_fallthru
        _
      %p137 = scmp.le.s32.totalorder 1, %s15
      %p138 = scmp.lt.s32.totalorder %s15, 3
      %p139 = pnand %p137, %p138
      %p140 = pneg %p139
      // Predicated region
      $region25: #{tpu_custom_call.1} parent=5 // pred_check
        _
      $region26: #{tpu_custom_call.1} parent=5 // pred_check_branch
        %142 = sbr.rel (%p139) target = $region28
      $region27: #{tpu_custom_call.1} parent=5 // pred_region
        %s143 = ssub.s32 %s15, 1
        // Predicated region
        $region29: #{tpu_custom_call.1} parent=27 // pred_check
          %p144 = pneg %p36
        $region30: #{tpu_custom_call.1} parent=27 // pred_check_branch
          %146 = sbr.rel (%p144) target = $region32
        $region31: #{tpu_custom_call.1} parent=27 // pred_region
          %147 = dma.done [#allocation5], 16
        $region32: #{tpu_custom_call.1} parent=27 // pred_fallthru
          _
        %s148 = sand.u32 %s49, 1
        %s149 = scalar_lea.sflag [#allocation3], %s148
        %s150 = sand.u32 %s49, 1
        %s151 = smul.addr %s150, 1024
        %s152 = scalar_lea.vmem [#allocation6], %s151
        // Predicated region
        $region33: #{tpu_custom_call.1} parent=27 // pred_check
          %p153 = pneg %p62
        $region34: #{tpu_custom_call.1} parent=27 // pred_check_branch
          %155 = sbr.rel (%p153) target = $region36
        $region35: #{tpu_custom_call.1} parent=27 // pred_region
          %156 = dma.done %s149, 16384
        $region36: #{tpu_custom_call.1} parent=27 // pred_fallthru
          _
        %157 = sfence
        %p158 = pneg %p36
        %p159 = pneg %p33
        %s160 = sand.u32 %s49, 1
        %s161 = scalar_lea.sflag [#allocation3], %s160
        %s162 = sand.u32 %s49, 1
        %s163 = smul.addr %s162, 1024
        %s164 = scalar_lea.vmem [#allocation6], %s163
        %p165 = pneg %p62
        %p166 = pneg %p59
        %p167 = pneg %p88
        %p168 = pneg %p85
        %s169 = sand.u32 %s75, 1
        %s170 = scalar_lea.sflag [#allocation4], %s169
        %s171 = sand.u32 %s75, 1
        %s172 = smul.addr %s171, 1024
        %s173 = scalar_lea.vmem [#allocation7], %s172
        %s174 = smul.u32 128, %s20
        %s175 = smul.u32 128, %s20
        %s176 = sld [smem:[#allocation2]]
        %s177 = sld [smem:[#allocation2 + $0x1]]
        %s178 = sld [smem:[#allocation2 + $0x2]]
        %s179 = sld [smem:[#allocation2 + $0x3]]
        %v180 = vld [vmem:[%s152] sm:$0xff]
        %v181 = vld [vmem:[%s152 + $0x8] sm:$0xff]
        %v182 = vld [vmem:[%s152 + $0x10] sm:$0xff]
        %v183 = vld [vmem:[%s152 + $0x18] sm:$0xff]
        %v184 = vld [vmem:[%s152 + $0x20] sm:$0xff]
        %v185 = vld [vmem:[%s152 + $0x28] sm:$0xff]
        %v186 = vld [vmem:[%s152 + $0x30] sm:$0xff]
        %v187 = vld [vmem:[%s152 + $0x38] sm:$0xff]
        %v188 = vld [vmem:[%s152 + $0x40] sm:$0xff]
        %v189 = vld [vmem:[%s152 + $0x48] sm:$0xff]
        %v190 = vld [vmem:[%s152 + $0x50] sm:$0xff]
        %v191 = vld [vmem:[%s152 + $0x58] sm:$0xff]
        %v192 = vld [vmem:[%s152 + $0x60] sm:$0xff]
        %v193 = vld [vmem:[%s152 + $0x68] sm:$0xff]
        %v194 = vld [vmem:[%s152 + $0x70] sm:$0xff]
        %v195 = vld [vmem:[%s152 + $0x78] sm:$0xff]
        %v196 = vld [vmem:[%s152 + $0x80] sm:$0xff]
        %v197 = vld [vmem:[%s152 + $0x88] sm:$0xff]
        %v198 = vld [vmem:[%s152 + $0x90] sm:$0xff]
        %v199 = vld [vmem:[%s152 + $0x98] sm:$0xff]
        %v200 = vld [vmem:[%s152 + $0xa0] sm:$0xff]
        %v201 = vld [vmem:[%s152 + $0xa8] sm:$0xff]
        %v202 = vld [vmem:[%s152 + $0xb0] sm:$0xff]
        %v203 = vld [vmem:[%s152 + $0xb8] sm:$0xff]
        %v204 = vld [vmem:[%s152 + $0xc0] sm:$0xff]
        %v205 = vld [vmem:[%s152 + $0xc8] sm:$0xff]
        %v206 = vld [vmem:[%s152 + $0xd0] sm:$0xff]
        %v207 = vld [vmem:[%s152 + $0xd8] sm:$0xff]
        %v208 = vld [vmem:[%s152 + $0xe0] sm:$0xff]
        %v209 = vld [vmem:[%s152 + $0xe8] sm:$0xff]
        %v210 = vld [vmem:[%s152 + $0xf0] sm:$0xff]
        %v211 = vld [vmem:[%s152 + $0xf8] sm:$0xff]
        %v212 = vld [vmem:[%s152 + $0x100] sm:$0xff]
        %v213 = vld [vmem:[%s152 + $0x108] sm:$0xff]
        %v214 = vld [vmem:[%s152 + $0x110] sm:$0xff]
        %v215 = vld [vmem:[%s152 + $0x118] sm:$0xff]
        %v216 = vld [vmem:[%s152 + $0x120] sm:$0xff]
        %v217 = vld [vmem:[%s152 + $0x128] sm:$0xff]
        %v218 = vld [vmem:[%s152 + $0x130] sm:$0xff]
        %v219 = vld [vmem:[%s152 + $0x138] sm:$0xff]
        %v220 = vld [vmem:[%s152 + $0x140] sm:$0xff]
        %v221 = vld [vmem:[%s152 + $0x148] sm:$0xff]
        %v222 = vld [vmem:[%s152 + $0x150] sm:$0xff]
        %v223 = vld [vmem:[%s152 + $0x158] sm:$0xff]
        %v224 = vld [vmem:[%s152 + $0x160] sm:$0xff]
        %v225 = vld [vmem:[%s152 + $0x168] sm:$0xff]
        %v226 = vld [vmem:[%s152 + $0x170] sm:$0xff]
        %v227 = vld [vmem:[%s152 + $0x178] sm:$0xff]
        %v228 = vld [vmem:[%s152 + $0x180] sm:$0xff]
        %v229 = vld [vmem:[%s152 + $0x188] sm:$0xff]
        %v230 = vld [vmem:[%s152 + $0x190] sm:$0xff]
        %v231 = vld [vmem:[%s152 + $0x198] sm:$0xff]
        %v232 = vld [vmem:[%s152 + $0x1a0] sm:$0xff]
        %v233 = vld [vmem:[%s152 + $0x1a8] sm:$0xff]
        %v234 = vld [vmem:[%s152 + $0x1b0] sm:$0xff]
        %v235 = vld [vmem:[%s152 + $0x1b8] sm:$0xff]
        %v236 = vld [vmem:[%s152 + $0x1c0] sm:$0xff]
        %v237 = vld [vmem:[%s152 + $0x1c8] sm:$0xff]
        %v238 = vld [vmem:[%s152 + $0x1d0] sm:$0xff]
        %v239 = vld [vmem:[%s152 + $0x1d8] sm:$0xff]
        %v240 = vld [vmem:[%s152 + $0x1e0] sm:$0xff]
        %v241 = vld [vmem:[%s152 + $0x1e8] sm:$0xff]
        %v242 = vld [vmem:[%s152 + $0x1f0] sm:$0xff]
        %v243 = vld [vmem:[%s152 + $0x1f8] sm:$0xff]
        %v244 = vld [vmem:[%s152 + $0x200] sm:$0xff]
        %v245 = vld [vmem:[%s152 + $0x208] sm:$0xff]
        %v246 = vld [vmem:[%s152 + $0x210] sm:$0xff]
        %v247 = vld [vmem:[%s152 + $0x218] sm:$0xff]
        %v248 = vld [vmem:[%s152 + $0x220] sm:$0xff]
        %v249 = vld [vmem:[%s152 + $0x228] sm:$0xff]
        %v250 = vld [vmem:[%s152 + $0x230] sm:$0xff]
        %v251 = vld [vmem:[%s152 + $0x238] sm:$0xff]
        %v252 = vld [vmem:[%s152 + $0x240] sm:$0xff]
        %v253 = vld [vmem:[%s152 + $0x248] sm:$0xff]
        %v254 = vld [vmem:[%s152 + $0x250] sm:$0xff]
        %v255 = vld [vmem:[%s152 + $0x258] sm:$0xff]
        %v256 = vld [vmem:[%s152 + $0x260] sm:$0xff]
        %v257 = vld [vmem:[%s152 + $0x268] sm:$0xff]
        %v258 = vld [vmem:[%s152 + $0x270] sm:$0xff]
        %v259 = vld [vmem:[%s152 + $0x278] sm:$0xff]
        %v260 = vld [vmem:[%s152 + $0x280] sm:$0xff]
        %v261 = vld [vmem:[%s152 + $0x288] sm:$0xff]
        %v262 = vld [vmem:[%s152 + $0x290] sm:$0xff]
        %v263 = vld [vmem:[%s152 + $0x298] sm:$0xff]
        %v264 = vld [vmem:[%s152 + $0x2a0] sm:$0xff]
        %v265 = vld [vmem:[%s152 + $0x2a8] sm:$0xff]
        %v266 = vld [vmem:[%s152 + $0x2b0] sm:$0xff]
        %v267 = vld [vmem:[%s152 + $0x2b8] sm:$0xff]
        %v268 = vld [vmem:[%s152 + $0x2c0] sm:$0xff]
        %v269 = vld [vmem:[%s152 + $0x2c8] sm:$0xff]
        %v270 = vld [vmem:[%s152 + $0x2d0] sm:$0xff]
        %v271 = vld [vmem:[%s152 + $0x2d8] sm:$0xff]
        %v272 = vld [vmem:[%s152 + $0x2e0] sm:$0xff]
        %v273 = vld [vmem:[%s152 + $0x2e8] sm:$0xff]
        %v274 = vld [vmem:[%s152 + $0x2f0] sm:$0xff]
        %v275 = vld [vmem:[%s152 + $0x2f8] sm:$0xff]
        %v276 = vld [vmem:[%s152 + $0x300] sm:$0xff]
        %v277 = vld [vmem:[%s152 + $0x308] sm:$0xff]
        %v278 = vld [vmem:[%s152 + $0x310] sm:$0xff]
        %v279 = vld [vmem:[%s152 + $0x318] sm:$0xff]
        %v280 = vld [vmem:[%s152 + $0x320] sm:$0xff]
        %v281 = vld [vmem:[%s152 + $0x328] sm:$0xff]
        %v282 = vld [vmem:[%s152 + $0x330] sm:$0xff]
        %v283 = vld [vmem:[%s152 + $0x338] sm:$0xff]
        %v284 = vld [vmem:[%s152 + $0x340] sm:$0xff]
        %v285 = vld [vmem:[%s152 + $0x348] sm:$0xff]
        %v286 = vld [vmem:[%s152 + $0x350] sm:$0xff]
        %v287 = vld [vmem:[%s152 + $0x358] sm:$0xff]
        %v288 = vld [vmem:[%s152 + $0x360] sm:$0xff]
        %v289 = vld [vmem:[%s152 + $0x368] sm:$0xff]
        %v290 = vld [vmem:[%s152 + $0x370] sm:$0xff]
        %v291 = vld [vmem:[%s152 + $0x378] sm:$0xff]
        %v292 = vld [vmem:[%s152 + $0x380] sm:$0xff]
        %v293 = vld [vmem:[%s152 + $0x388] sm:$0xff]
        %v294 = vld [vmem:[%s152 + $0x390] sm:$0xff]
        %v295 = vld [vmem:[%s152 + $0x398] sm:$0xff]
        %v296 = vld [vmem:[%s152 + $0x3a0] sm:$0xff]
        %v297 = vld [vmem:[%s152 + $0x3a8] sm:$0xff]
        %v298 = vld [vmem:[%s152 + $0x3b0] sm:$0xff]
        %v299 = vld [vmem:[%s152 + $0x3b8] sm:$0xff]
        %v300 = vld [vmem:[%s152 + $0x3c0] sm:$0xff]
        %v301 = vld [vmem:[%s152 + $0x3c8] sm:$0xff]
        %v302 = vld [vmem:[%s152 + $0x3d0] sm:$0xff]
        %v303 = vld [vmem:[%s152 + $0x3d8] sm:$0xff]
        %v304 = vld [vmem:[%s152 + $0x3e0] sm:$0xff]
        %v305 = vld [vmem:[%s152 + $0x3e8] sm:$0xff]
        %v306 = vld [vmem:[%s152 + $0x3f0] sm:$0xff]
        %v307 = vld [vmem:[%s152 + $0x3f8] sm:$0xff]
        %v308 = vstv %s179
        %v309 = vmul.f32 %v180, %v308
        %v310 = vmul.f32 %v181, %v308
        %v311 = vmul.f32 %v182, %v308
        %v312 = vmul.f32 %v183, %v308
        %v313 = vmul.f32 %v184, %v308
        %v314 = vmul.f32 %v185, %v308
        %v315 = vmul.f32 %v186, %v308
        %v316 = vmul.f32 %v187, %v308
        %v317 = vmul.f32 %v188, %v308
        %v318 = vmul.f32 %v189, %v308
        %v319 = vmul.f32 %v190, %v308
        %v320 = vmul.f32 %v191, %v308
        %v321 = vmul.f32 %v192, %v308
        %v322 = vmul.f32 %v193, %v308
        %v323 = vmul.f32 %v194, %v308
        %v324 = vmul.f32 %v195, %v308
        %v325 = vmul.f32 %v196, %v308
        %v326 = vmul.f32 %v197, %v308
        %v327 = vmul.f32 %v198, %v308
        %v328 = vmul.f32 %v199, %v308
        %v329 = vmul.f32 %v200, %v308
        %v330 = vmul.f32 %v201, %v308
        %v331 = vmul.f32 %v202, %v308
        %v332 = vmul.f32 %v203, %v308
        %v333 = vmul.f32 %v204, %v308
        %v334 = vmul.f32 %v205, %v308
        %v335 = vmul.f32 %v206, %v308
        %v336 = vmul.f32 %v207, %v308
        %v337 = vmul.f32 %v208, %v308
        %v338 = vmul.f32 %v209, %v308
        %v339 = vmul.f32 %v210, %v308
        %v340 = vmul.f32 %v211, %v308
        %v341 = vmul.f32 %v212, %v308
        %v342 = vmul.f32 %v213, %v308
        %v343 = vmul.f32 %v214, %v308
        %v344 = vmul.f32 %v215, %v308
        %v345 = vmul.f32 %v216, %v308
        %v346 = vmul.f32 %v217, %v308
        %v347 = vmul.f32 %v218, %v308
        %v348 = vmul.f32 %v219, %v308
        %v349 = vmul.f32 %v220, %v308
        %v350 = vmul.f32 %v221, %v308
        %v351 = vmul.f32 %v222, %v308
        %v352 = vmul.f32 %v223, %v308
        %v353 = vmul.f32 %v224, %v308
        %v354 = vmul.f32 %v225, %v308
        %v355 = vmul.f32 %v226, %v308
        %v356 = vmul.f32 %v227, %v308
        %v357 = vmul.f32 %v228, %v308
        %v358 = vmul.f32 %v229, %v308
        %v359 = vmul.f32 %v230, %v308
        %v360 = vmul.f32 %v231, %v308
        %v361 = vmul.f32 %v232, %v308
        %v362 = vmul.f32 %v233, %v308
        %v363 = vmul.f32 %v234, %v308
        %v364 = vmul.f32 %v235, %v308
        %v365 = vmul.f32 %v236, %v308
        %v366 = vmul.f32 %v237, %v308
        %v367 = vmul.f32 %v238, %v308
        %v368 = vmul.f32 %v239, %v308
        %v369 = vmul.f32 %v240, %v308
        %v370 = vmul.f32 %v241, %v308
        %v371 = vmul.f32 %v242, %v308
        %v372 = vmul.f32 %v243, %v308
        %v373 = vmul.f32 %v244, %v308
        %v374 = vmul.f32 %v245, %v308
        %v375 = vmul.f32 %v246, %v308
        %v376 = vmul.f32 %v247, %v308
        %v377 = vmul.f32 %v248, %v308
        %v378 = vmul.f32 %v249, %v308
        %v379 = vmul.f32 %v250, %v308
        %v380 = vmul.f32 %v251, %v308
        %v381 = vmul.f32 %v252, %v308
        %v382 = vmul.f32 %v253, %v308
        %v383 = vmul.f32 %v254, %v308
        %v384 = vmul.f32 %v255, %v308
        %v385 = vmul.f32 %v256, %v308
        %v386 = vmul.f32 %v257, %v308
        %v387 = vmul.f32 %v258, %v308
        %v388 = vmul.f32 %v259, %v308
        %v389 = vmul.f32 %v260, %v308
        %v390 = vmul.f32 %v261, %v308
        %v391 = vmul.f32 %v262, %v308
        %v392 = vmul.f32 %v263, %v308
        %v393 = vmul.f32 %v264, %v308
        %v394 = vmul.f32 %v265, %v308
        %v395 = vmul.f32 %v266, %v308
        %v396 = vmul.f32 %v267, %v308
        %v397 = vmul.f32 %v268, %v308
        %v398 = vmul.f32 %v269, %v308
        %v399 = vmul.f32 %v270, %v308
        %v400 = vmul.f32 %v271, %v308
        %v401 = vmul.f32 %v272, %v308
        %v402 = vmul.f32 %v273, %v308
        %v403 = vmul.f32 %v274, %v308
        %v404 = vmul.f32 %v275, %v308
        %v405 = vmul.f32 %v276, %v308
        %v406 = vmul.f32 %v277, %v308
        %v407 = vmul.f32 %v278, %v308
        %v408 = vmul.f32 %v279, %v308
        %v409 = vmul.f32 %v280, %v308
        %v410 = vmul.f32 %v281, %v308
        %v411 = vmul.f32 %v282, %v308
        %v412 = vmul.f32 %v283, %v308
        %v413 = vmul.f32 %v284, %v308
        %v414 = vmul.f32 %v285, %v308
        %v415 = vmul.f32 %v286, %v308
        %v416 = vmul.f32 %v287, %v308
        %v417 = vmul.f32 %v288, %v308
        %v418 = vmul.f32 %v289, %v308
        %v419 = vmul.f32 %v290, %v308
        %v420 = vmul.f32 %v291, %v308
        %v421 = vmul.f32 %v292, %v308
        %v422 = vmul.f32 %v293, %v308
        %v423 = vmul.f32 %v294, %v308
        %v424 = vmul.f32 %v295, %v308
        %v425 = vmul.f32 %v296, %v308
        %v426 = vmul.f32 %v297, %v308
        %v427 = vmul.f32 %v298, %v308
        %v428 = vmul.f32 %v299, %v308
        %v429 = vmul.f32 %v300, %v308
        %v430 = vmul.f32 %v301, %v308
        %v431 = vmul.f32 %v302, %v308
        %v432 = vmul.f32 %v303, %v308
        %v433 = vmul.f32 %v304, %v308
        %v434 = vmul.f32 %v305, %v308
        %v435 = vmul.f32 %v306, %v308
        %v436 = vmul.f32 %v307, %v308
        %v437 = vstv %s178
        %v438 = vadd.f32 %v309, %v437
        %v439 = vadd.f32 %v310, %v437
        %v440 = vadd.f32 %v311, %v437
        %v441 = vadd.f32 %v312, %v437
        %v442 = vadd.f32 %v313, %v437
        %v443 = vadd.f32 %v314, %v437
        %v444 = vadd.f32 %v315, %v437
        %v445 = vadd.f32 %v316, %v437
        %v446 = vadd.f32 %v317, %v437
        %v447 = vadd.f32 %v318, %v437
        %v448 = vadd.f32 %v319, %v437
        %v449 = vadd.f32 %v320, %v437
        %v450 = vadd.f32 %v321, %v437
        %v451 = vadd.f32 %v322, %v437
        %v452 = vadd.f32 %v323, %v437
        %v453 = vadd.f32 %v324, %v437
        %v454 = vadd.f32 %v325, %v437
        %v455 = vadd.f32 %v326, %v437
        %v456 = vadd.f32 %v327, %v437
        %v457 = vadd.f32 %v328, %v437
        %v458 = vadd.f32 %v329, %v437
        %v459 = vadd.f32 %v330, %v437
        %v460 = vadd.f32 %v331, %v437
        %v461 = vadd.f32 %v332, %v437
        %v462 = vadd.f32 %v333, %v437
        %v463 = vadd.f32 %v334, %v437
        %v464 = vadd.f32 %v335, %v437
        %v465 = vadd.f32 %v336, %v437
        %v466 = vadd.f32 %v337, %v437
        %v467 = vadd.f32 %v338, %v437
        %v468 = vadd.f32 %v339, %v437
        %v469 = vadd.f32 %v340, %v437
        %v470 = vadd.f32 %v341, %v437
        %v471 = vadd.f32 %v342, %v437
        %v472 = vadd.f32 %v343, %v437
        %v473 = vadd.f32 %v344, %v437
        %v474 = vadd.f32 %v345, %v437
        %v475 = vadd.f32 %v346, %v437
        %v476 = vadd.f32 %v347, %v437
        %v477 = vadd.f32 %v348, %v437
        %v478 = vadd.f32 %v349, %v437
        %v479 = vadd.f32 %v350, %v437
        %v480 = vadd.f32 %v351, %v437
        %v481 = vadd.f32 %v352, %v437
        %v482 = vadd.f32 %v353, %v437
        %v483 = vadd.f32 %v354, %v437
        %v484 = vadd.f32 %v355, %v437
        %v485 = vadd.f32 %v356, %v437
        %v486 = vadd.f32 %v357, %v437
        %v487 = vadd.f32 %v358, %v437
        %v488 = vadd.f32 %v359, %v437
        %v489 = vadd.f32 %v360, %v437
        %v490 = vadd.f32 %v361, %v437
        %v491 = vadd.f32 %v362, %v437
        %v492 = vadd.f32 %v363, %v437
        %v493 = vadd.f32 %v364, %v437
        %v494 = vadd.f32 %v365, %v437
        %v495 = vadd.f32 %v366, %v437
        %v496 = vadd.f32 %v367, %v437
        %v497 = vadd.f32 %v368, %v437
        %v498 = vadd.f32 %v369, %v437
        %v499 = vadd.f32 %v370, %v437
        %v500 = vadd.f32 %v371, %v437
        %v501 = vadd.f32 %v372, %v437
        %v502 = vadd.f32 %v373, %v437
        %v503 = vadd.f32 %v374, %v437
        %v504 = vadd.f32 %v375, %v437
        %v505 = vadd.f32 %v376, %v437
        %v506 = vadd.f32 %v377, %v437
        %v507 = vadd.f32 %v378, %v437
        %v508 = vadd.f32 %v379, %v437
        %v509 = vadd.f32 %v380, %v437
        %v510 = vadd.f32 %v381, %v437
        %v511 = vadd.f32 %v382, %v437
        %v512 = vadd.f32 %v383, %v437
        %v513 = vadd.f32 %v384, %v437
        %v514 = vadd.f32 %v385, %v437
        %v515 = vadd.f32 %v386, %v437
        %v516 = vadd.f32 %v387, %v437
        %v517 = vadd.f32 %v388, %v437
        %v518 = vadd.f32 %v389, %v437
        %v519 = vadd.f32 %v390, %v437
        %v520 = vadd.f32 %v391, %v437
        %v521 = vadd.f32 %v392, %v437
        %v522 = vadd.f32 %v393, %v437
        %v523 = vadd.f32 %v394, %v437
        %v524 = vadd.f32 %v395, %v437
        %v525 = vadd.f32 %v396, %v437
        %v526 = vadd.f32 %v397, %v437
        %v527 = vadd.f32 %v398, %v437
        %v528 = vadd.f32 %v399, %v437
        %v529 = vadd.f32 %v400, %v437
        %v530 = vadd.f32 %v401, %v437
        %v531 = vadd.f32 %v402, %v437
        %v532 = vadd.f32 %v403, %v437
        %v533 = vadd.f32 %v404, %v437
        %v534 = vadd.f32 %v405, %v437
        %v535 = vadd.f32 %v406, %v437
        %v536 = vadd.f32 %v407, %v437
        %v537 = vadd.f32 %v408, %v437
        %v538 = vadd.f32 %v409, %v437
        %v539 = vadd.f32 %v410, %v437
        %v540 = vadd.f32 %v411, %v437
        %v541 = vadd.f32 %v412, %v437
        %v542 = vadd.f32 %v413, %v437
        %v543 = vadd.f32 %v414, %v437
        %v544 = vadd.f32 %v415, %v437
        %v545 = vadd.f32 %v416, %v437
        %v546 = vadd.f32 %v417, %v437
        %v547 = vadd.f32 %v418, %v437
        %v548 = vadd.f32 %v419, %v437
        %v549 = vadd.f32 %v420, %v437
        %v550 = vadd.f32 %v421, %v437
        %v551 = vadd.f32 %v422, %v437
        %v552 = vadd.f32 %v423, %v437
        %v553 = vadd.f32 %v424, %v437
        %v554 = vadd.f32 %v425, %v437
        %v555 = vadd.f32 %v426, %v437
        %v556 = vadd.f32 %v427, %v437
        %v557 = vadd.f32 %v428, %v437
        %v558 = vadd.f32 %v429, %v437
        %v559 = vadd.f32 %v430, %v437
        %v560 = vadd.f32 %v431, %v437
        %v561 = vadd.f32 %v432, %v437
        %v562 = vadd.f32 %v433, %v437
        %v563 = vadd.f32 %v434, %v437
        %v564 = vadd.f32 %v435, %v437
        %v565 = vadd.f32 %v436, %v437
        %v566 = vmul.f32 %v438, %v180
        %v567 = vmul.f32 %v439, %v181
        %v568 = vmul.f32 %v440, %v182
        %v569 = vmul.f32 %v441, %v183
        %v570 = vmul.f32 %v442, %v184
        %v571 = vmul.f32 %v443, %v185
        %v572 = vmul.f32 %v444, %v186
        %v573 = vmul.f32 %v445, %v187
        %v574 = vmul.f32 %v446, %v188
        %v575 = vmul.f32 %v447, %v189
        %v576 = vmul.f32 %v448, %v190
        %v577 = vmul.f32 %v449, %v191
        %v578 = vmul.f32 %v450, %v192
        %v579 = vmul.f32 %v451, %v193
        %v580 = vmul.f32 %v452, %v194
        %v581 = vmul.f32 %v453, %v195
        %v582 = vmul.f32 %v454, %v196
        %v583 = vmul.f32 %v455, %v197
        %v584 = vmul.f32 %v456, %v198
        %v585 = vmul.f32 %v457, %v199
        %v586 = vmul.f32 %v458, %v200
        %v587 = vmul.f32 %v459, %v201
        %v588 = vmul.f32 %v460, %v202
        %v589 = vmul.f32 %v461, %v203
        %v590 = vmul.f32 %v462, %v204
        %v591 = vmul.f32 %v463, %v205
        %v592 = vmul.f32 %v464, %v206
        %v593 = vmul.f32 %v465, %v207
        %v594 = vmul.f32 %v466, %v208
        %v595 = vmul.f32 %v467, %v209
        %v596 = vmul.f32 %v468, %v210
        %v597 = vmul.f32 %v469, %v211
        %v598 = vmul.f32 %v470, %v212
        %v599 = vmul.f32 %v471, %v213
        %v600 = vmul.f32 %v472, %v214
        %v601 = vmul.f32 %v473, %v215
        %v602 = vmul.f32 %v474, %v216
        %v603 = vmul.f32 %v475, %v217
        %v604 = vmul.f32 %v476, %v218
        %v605 = vmul.f32 %v477, %v219
        %v606 = vmul.f32 %v478, %v220
        %v607 = vmul.f32 %v479, %v221
        %v608 = vmul.f32 %v480, %v222
        %v609 = vmul.f32 %v481, %v223
        %v610 = vmul.f32 %v482, %v224
        %v611 = vmul.f32 %v483, %v225
        %v612 = vmul.f32 %v484, %v226
        %v613 = vmul.f32 %v485, %v227
        %v614 = vmul.f32 %v486, %v228
        %v615 = vmul.f32 %v487, %v229
        %v616 = vmul.f32 %v488, %v230
        %v617 = vmul.f32 %v489, %v231
        %v618 = vmul.f32 %v490, %v232
        %v619 = vmul.f32 %v491, %v233
        %v620 = vmul.f32 %v492, %v234
        %v621 = vmul.f32 %v493, %v235
        %v622 = vmul.f32 %v494, %v236
        %v623 = vmul.f32 %v495, %v237
        %v624 = vmul.f32 %v496, %v238
        %v625 = vmul.f32 %v497, %v239
        %v626 = vmul.f32 %v498, %v240
        %v627 = vmul.f32 %v499, %v241
        %v628 = vmul.f32 %v500, %v242
        %v629 = vmul.f32 %v501, %v243
        %v630 = vmul.f32 %v502, %v244
        %v631 = vmul.f32 %v503, %v245
        %v632 = vmul.f32 %v504, %v246
        %v633 = vmul.f32 %v505, %v247
        %v634 = vmul.f32 %v506, %v248
        %v635 = vmul.f32 %v507, %v249
        %v636 = vmul.f32 %v508, %v250
        %v637 = vmul.f32 %v509, %v251
        %v638 = vmul.f32 %v510, %v252
        %v639 = vmul.f32 %v511, %v253
        %v640 = vmul.f32 %v512, %v254
        %v641 = vmul.f32 %v513, %v255
        %v642 = vmul.f32 %v514, %v256
        %v643 = vmul.f32 %v515, %v257
        %v644 = vmul.f32 %v516, %v258
        %v645 = vmul.f32 %v517, %v259
        %v646 = vmul.f32 %v518, %v260
        %v647 = vmul.f32 %v519, %v261
        %v648 = vmul.f32 %v520, %v262
        %v649 = vmul.f32 %v521, %v263
        %v650 = vmul.f32 %v522, %v264
        %v651 = vmul.f32 %v523, %v265
        %v652 = vmul.f32 %v524, %v266
        %v653 = vmul.f32 %v525, %v267
        %v654 = vmul.f32 %v526, %v268
        %v655 = vmul.f32 %v527, %v269
        %v656 = vmul.f32 %v528, %v270
        %v657 = vmul.f32 %v529, %v271
        %v658 = vmul.f32 %v530, %v272
        %v659 = vmul.f32 %v531, %v273
        %v660 = vmul.f32 %v532, %v274
        %v661 = vmul.f32 %v533, %v275
        %v662 = vmul.f32 %v534, %v276
        %v663 = vmul.f32 %v535, %v277
        %v664 = vmul.f32 %v536, %v278
        %v665 = vmul.f32 %v537, %v279
        %v666 = vmul.f32 %v538, %v280
        %v667 = vmul.f32 %v539, %v281
        %v668 = vmul.f32 %v540, %v282
        %v669 = vmul.f32 %v541, %v283
        %v670 = vmul.f32 %v542, %v284
        %v671 = vmul.f32 %v543, %v285
        %v672 = vmul.f32 %v544, %v286
        %v673 = vmul.f32 %v545, %v287
        %v674 = vmul.f32 %v546, %v288
        %v675 = vmul.f32 %v547, %v289
        %v676 = vmul.f32 %v548, %v290
        %v677 = vmul.f32 %v549, %v291
        %v678 = vmul.f32 %v550, %v292
        %v679 = vmul.f32 %v551, %v293
        %v680 = vmul.f32 %v552, %v294
        %v681 = vmul.f32 %v553, %v295
        %v682 = vmul.f32 %v554, %v296
        %v683 = vmul.f32 %v555, %v297
        %v684 = vmul.f32 %v556, %v298
        %v685 = vmul.f32 %v557, %v299
        %v686 = vmul.f32 %v558, %v300
        %v687 = vmul.f32 %v559, %v301
        %v688 = vmul.f32 %v560, %v302
        %v689 = vmul.f32 %v561, %v303
        %v690 = vmul.f32 %v562, %v304
        %v691 = vmul.f32 %v563, %v305
        %v692 = vmul.f32 %v564, %v306
        %v693 = vmul.f32 %v565, %v307
        %v694 = vstv %s177
        %v695 = vadd.f32 %v566, %v694
        %v696 = vadd.f32 %v567, %v694
        %v697 = vadd.f32 %v568, %v694
        %v698 = vadd.f32 %v569, %v694
        %v699 = vadd.f32 %v570, %v694
        %v700 = vadd.f32 %v571, %v694
        %v701 = vadd.f32 %v572, %v694
        %v702 = vadd.f32 %v573, %v694
        %v703 = vadd.f32 %v574, %v694
        %v704 = vadd.f32 %v575, %v694
        %v705 = vadd.f32 %v576, %v694
        %v706 = vadd.f32 %v577, %v694
        %v707 = vadd.f32 %v578, %v694
        %v708 = vadd.f32 %v579, %v694
        %v709 = vadd.f32 %v580, %v694
        %v710 = vadd.f32 %v581, %v694
        %v711 = vadd.f32 %v582, %v694
        %v712 = vadd.f32 %v583, %v694
        %v713 = vadd.f32 %v584, %v694
        %v714 = vadd.f32 %v585, %v694
        %v715 = vadd.f32 %v586, %v694
        %v716 = vadd.f32 %v587, %v694
        %v717 = vadd.f32 %v588, %v694
        %v718 = vadd.f32 %v589, %v694
        %v719 = vadd.f32 %v590, %v694
        %v720 = vadd.f32 %v591, %v694
        %v721 = vadd.f32 %v592, %v694
        %v722 = vadd.f32 %v593, %v694
        %v723 = vadd.f32 %v594, %v694
        %v724 = vadd.f32 %v595, %v694
        %v725 = vadd.f32 %v596, %v694
        %v726 = vadd.f32 %v597, %v694
        %v727 = vadd.f32 %v598, %v694
        %v728 = vadd.f32 %v599, %v694
        %v729 = vadd.f32 %v600, %v694
        %v730 = vadd.f32 %v601, %v694
        %v731 = vadd.f32 %v602, %v694
        %v732 = vadd.f32 %v603, %v694
        %v733 = vadd.f32 %v604, %v694
        %v734 = vadd.f32 %v605, %v694
        %v735 = vadd.f32 %v606, %v694
        %v736 = vadd.f32 %v607, %v694
        %v737 = vadd.f32 %v608, %v694
        %v738 = vadd.f32 %v609, %v694
        %v739 = vadd.f32 %v610, %v694
        %v740 = vadd.f32 %v611, %v694
        %v741 = vadd.f32 %v612, %v694
        %v742 = vadd.f32 %v613, %v694
        %v743 = vadd.f32 %v614, %v694
        %v744 = vadd.f32 %v615, %v694
        %v745 = vadd.f32 %v616, %v694
        %v746 = vadd.f32 %v617, %v694
        %v747 = vadd.f32 %v618, %v694
        %v748 = vadd.f32 %v619, %v694
        %v749 = vadd.f32 %v620, %v694
        %v750 = vadd.f32 %v621, %v694
        %v751 = vadd.f32 %v622, %v694
        %v752 = vadd.f32 %v623, %v694
        %v753 = vadd.f32 %v624, %v694
        %v754 = vadd.f32 %v625, %v694
        %v755 = vadd.f32 %v626, %v694
        %v756 = vadd.f32 %v627, %v694
        %v757 = vadd.f32 %v628, %v694
        %v758 = vadd.f32 %v629, %v694
        %v759 = vadd.f32 %v630, %v694
        %v760 = vadd.f32 %v631, %v694
        %v761 = vadd.f32 %v632, %v694
        %v762 = vadd.f32 %v633, %v694
        %v763 = vadd.f32 %v634, %v694
        %v764 = vadd.f32 %v635, %v694
        %v765 = vadd.f32 %v636, %v694
        %v766 = vadd.f32 %v637, %v694
        %v767 = vadd.f32 %v638, %v694
        %v768 = vadd.f32 %v639, %v694
        %v769 = vadd.f32 %v640, %v694
        %v770 = vadd.f32 %v641, %v694
        %v771 = vadd.f32 %v642, %v694
        %v772 = vadd.f32 %v643, %v694
        %v773 = vadd.f32 %v644, %v694
        %v774 = vadd.f32 %v645, %v694
        %v775 = vadd.f32 %v646, %v694
        %v776 = vadd.f32 %v647, %v694
        %v777 = vadd.f32 %v648, %v694
        %v778 = vadd.f32 %v649, %v694
        %v779 = vadd.f32 %v650, %v694
        %v780 = vadd.f32 %v651, %v694
        %v781 = vadd.f32 %v652, %v694
        %v782 = vadd.f32 %v653, %v694
        %v783 = vadd.f32 %v654, %v694
        %v784 = vadd.f32 %v655, %v694
        %v785 = vadd.f32 %v656, %v694
        %v786 = vadd.f32 %v657, %v694
        %v787 = vadd.f32 %v658, %v694
        %v788 = vadd.f32 %v659, %v694
        %v789 = vadd.f32 %v660, %v694
        %v790 = vadd.f32 %v661, %v694
        %v791 = vadd.f32 %v662, %v694
        %v792 = vadd.f32 %v663, %v694
        %v793 = vadd.f32 %v664, %v694
        %v794 = vadd.f32 %v665, %v694
        %v795 = vadd.f32 %v666, %v694
        %v796 = vadd.f32 %v667, %v694
        %v797 = vadd.f32 %v668, %v694
        %v798 = vadd.f32 %v669, %v694
        %v799 = vadd.f32 %v670, %v694
        %v800 = vadd.f32 %v671, %v694
        %v801 = vadd.f32 %v672, %v694
        %v802 = vadd.f32 %v673, %v694
        %v803 = vadd.f32 %v674, %v694
        %v804 = vadd.f32 %v675, %v694
        %v805 = vadd.f32 %v676, %v694
        %v806 = vadd.f32 %v677, %v694
        %v807 = vadd.f32 %v678, %v694
        %v808 = vadd.f32 %v679, %v694
        %v809 = vadd.f32 %v680, %v694
        %v810 = vadd.f32 %v681, %v694
        %v811 = vadd.f32 %v682, %v694
        %v812 = vadd.f32 %v683, %v694
        %v813 = vadd.f32 %v684, %v694
        %v814 = vadd.f32 %v685, %v694
        %v815 = vadd.f32 %v686, %v694
        %v816 = vadd.f32 %v687, %v694
        %v817 = vadd.f32 %v688, %v694
        %v818 = vadd.f32 %v689, %v694
        %v819 = vadd.f32 %v690, %v694
        %v820 = vadd.f32 %v691, %v694
        %v821 = vadd.f32 %v692, %v694
        %v822 = vadd.f32 %v693, %v694
        %v823 = vmul.f32 %v695, %v180
        %v824 = vmul.f32 %v696, %v181
        %v825 = vmul.f32 %v697, %v182
        %v826 = vmul.f32 %v698, %v183
        %v827 = vmul.f32 %v699, %v184
        %v828 = vmul.f32 %v700, %v185
        %v829 = vmul.f32 %v701, %v186
        %v830 = vmul.f32 %v702, %v187
        %v831 = vmul.f32 %v703, %v188
        %v832 = vmul.f32 %v704, %v189
        %v833 = vmul.f32 %v705, %v190
        %v834 = vmul.f32 %v706, %v191
        %v835 = vmul.f32 %v707, %v192
        %v836 = vmul.f32 %v708, %v193
        %v837 = vmul.f32 %v709, %v194
        %v838 = vmul.f32 %v710, %v195
        %v839 = vmul.f32 %v711, %v196
        %v840 = vmul.f32 %v712, %v197
        %v841 = vmul.f32 %v713, %v198
        %v842 = vmul.f32 %v714, %v199
        %v843 = vmul.f32 %v715, %v200
        %v844 = vmul.f32 %v716, %v201
        %v845 = vmul.f32 %v717, %v202
        %v846 = vmul.f32 %v718, %v203
        %v847 = vmul.f32 %v719, %v204
        %v848 = vmul.f32 %v720, %v205
        %v849 = vmul.f32 %v721, %v206
        %v850 = vmul.f32 %v722, %v207
        %v851 = vmul.f32 %v723, %v208
        %v852 = vmul.f32 %v724, %v209
        %v853 = vmul.f32 %v725, %v210
        %v854 = vmul.f32 %v726, %v211
        %v855 = vmul.f32 %v727, %v212
        %v856 = vmul.f32 %v728, %v213
        %v857 = vmul.f32 %v729, %v214
        %v858 = vmul.f32 %v730, %v215
        %v859 = vmul.f32 %v731, %v216
        %v860 = vmul.f32 %v732, %v217
        %v861 = vmul.f32 %v733, %v218
        %v862 = vmul.f32 %v734, %v219
        %v863 = vmul.f32 %v735, %v220
        %v864 = vmul.f32 %v736, %v221
        %v865 = vmul.f32 %v737, %v222
        %v866 = vmul.f32 %v738, %v223
        %v867 = vmul.f32 %v739, %v224
        %v868 = vmul.f32 %v740, %v225
        %v869 = vmul.f32 %v741, %v226
        %v870 = vmul.f32 %v742, %v227
        %v871 = vmul.f32 %v743, %v228
        %v872 = vmul.f32 %v744, %v229
        %v873 = vmul.f32 %v745, %v230
        %v874 = vmul.f32 %v746, %v231
        %v875 = vmul.f32 %v747, %v232
        %v876 = vmul.f32 %v748, %v233
        %v877 = vmul.f32 %v749, %v234
        %v878 = vmul.f32 %v750, %v235
        %v879 = vmul.f32 %v751, %v236
        %v880 = vmul.f32 %v752, %v237
        %v881 = vmul.f32 %v753, %v238
        %v882 = vmul.f32 %v754, %v239
        %v883 = vmul.f32 %v755, %v240
        %v884 = vmul.f32 %v756, %v241
        %v885 = vmul.f32 %v757, %v242
        %v886 = vmul.f32 %v758, %v243
        %v887 = vmul.f32 %v759, %v244
        %v888 = vmul.f32 %v760, %v245
        %v889 = vmul.f32 %v761, %v246
        %v890 = vmul.f32 %v762, %v247
        %v891 = vmul.f32 %v763, %v248
        %v892 = vmul.f32 %v764, %v249
        %v893 = vmul.f32 %v765, %v250
        %v894 = vmul.f32 %v766, %v251
        %v895 = vmul.f32 %v767, %v252
        %v896 = vmul.f32 %v768, %v253
        %v897 = vmul.f32 %v769, %v254
        %v898 = vmul.f32 %v770, %v255
        %v899 = vmul.f32 %v771, %v256
        %v900 = vmul.f32 %v772, %v257
        %v901 = vmul.f32 %v773, %v258
        %v902 = vmul.f32 %v774, %v259
        %v903 = vmul.f32 %v775, %v260
        %v904 = vmul.f32 %v776, %v261
        %v905 = vmul.f32 %v777, %v262
        %v906 = vmul.f32 %v778, %v263
        %v907 = vmul.f32 %v779, %v264
        %v908 = vmul.f32 %v780, %v265
        %v909 = vmul.f32 %v781, %v266
        %v910 = vmul.f32 %v782, %v267
        %v911 = vmul.f32 %v783, %v268
        %v912 = vmul.f32 %v784, %v269
        %v913 = vmul.f32 %v785, %v270
        %v914 = vmul.f32 %v786, %v271
        %v915 = vmul.f32 %v787, %v272
        %v916 = vmul.f32 %v788, %v273
        %v917 = vmul.f32 %v789, %v274
        %v918 = vmul.f32 %v790, %v275
        %v919 = vmul.f32 %v791, %v276
        %v920 = vmul.f32 %v792, %v277
        %v921 = vmul.f32 %v793, %v278
        %v922 = vmul.f32 %v794, %v279
        %v923 = vmul.f32 %v795, %v280
        %v924 = vmul.f32 %v796, %v281
        %v925 = vmul.f32 %v797, %v282
        %v926 = vmul.f32 %v798, %v283
        %v927 = vmul.f32 %v799, %v284
        %v928 = vmul.f32 %v800, %v285
        %v929 = vmul.f32 %v801, %v286
        %v930 = vmul.f32 %v802, %v287
        %v931 = vmul.f32 %v803, %v288
        %v932 = vmul.f32 %v804, %v289
        %v933 = vmul.f32 %v805, %v290
        %v934 = vmul.f32 %v806, %v291
        %v935 = vmul.f32 %v807, %v292
        %v936 = vmul.f32 %v808, %v293
        %v937 = vmul.f32 %v809, %v294
        %v938 = vmul.f32 %v810, %v295
        %v939 = vmul.f32 %v811, %v296
        %v940 = vmul.f32 %v812, %v297
        %v941 = vmul.f32 %v813, %v298
        %v942 = vmul.f32 %v814, %v299
        %v943 = vmul.f32 %v815, %v300
        %v944 = vmul.f32 %v816, %v301
        %v945 = vmul.f32 %v817, %v302
        %v946 = vmul.f32 %v818, %v303
        %v947 = vmul.f32 %v819, %v304
        %v948 = vmul.f32 %v820, %v305
        %v949 = vmul.f32 %v821, %v306
        %v950 = vmul.f32 %v822, %v307
        %v951 = vstv %s176
        %v952 = vadd.f32 %v823, %v951
        %v953 = vadd.f32 %v824, %v951
        %v954 = vadd.f32 %v825, %v951
        %v955 = vadd.f32 %v826, %v951
        %v956 = vadd.f32 %v827, %v951
        %v957 = vadd.f32 %v828, %v951
        %v958 = vadd.f32 %v829, %v951
        %v959 = vadd.f32 %v830, %v951
        %v960 = vadd.f32 %v831, %v951
        %v961 = vadd.f32 %v832, %v951
        %v962 = vadd.f32 %v833, %v951
        %v963 = vadd.f32 %v834, %v951
        %v964 = vadd.f32 %v835, %v951
        %v965 = vadd.f32 %v836, %v951
        %v966 = vadd.f32 %v837, %v951
        %v967 = vadd.f32 %v838, %v951
        %v968 = vadd.f32 %v839, %v951
        %v969 = vadd.f32 %v840, %v951
        %v970 = vadd.f32 %v841, %v951
        %v971 = vadd.f32 %v842, %v951
        %v972 = vadd.f32 %v843, %v951
        %v973 = vadd.f32 %v844, %v951
        %v974 = vadd.f32 %v845, %v951
        %v975 = vadd.f32 %v846, %v951
        %v976 = vadd.f32 %v847, %v951
        %v977 = vadd.f32 %v848, %v951
        %v978 = vadd.f32 %v849, %v951
        %v979 = vadd.f32 %v850, %v951
        %v980 = vadd.f32 %v851, %v951
        %v981 = vadd.f32 %v852, %v951
        %v982 = vadd.f32 %v853, %v951
        %v983 = vadd.f32 %v854, %v951
        %v984 = vadd.f32 %v855, %v951
        %v985 = vadd.f32 %v856, %v951
        %v986 = vadd.f32 %v857, %v951
        %v987 = vadd.f32 %v858, %v951
        %v988 = vadd.f32 %v859, %v951
        %v989 = vadd.f32 %v860, %v951
        %v990 = vadd.f32 %v861, %v951
        %v991 = vadd.f32 %v862, %v951
        %v992 = vadd.f32 %v863, %v951
        %v993 = vadd.f32 %v864, %v951
        %v994 = vadd.f32 %v865, %v951
        %v995 = vadd.f32 %v866, %v951
        %v996 = vadd.f32 %v867, %v951
        %v997 = vadd.f32 %v868, %v951
        %v998 = vadd.f32 %v869, %v951
        %v999 = vadd.f32 %v870, %v951
        %v1000 = vadd.f32 %v871, %v951
        %v1001 = vadd.f32 %v872, %v951
        %v1002 = vadd.f32 %v873, %v951
        %v1003 = vadd.f32 %v874, %v951
        %v1004 = vadd.f32 %v875, %v951
        %v1005 = vadd.f32 %v876, %v951
        %v1006 = vadd.f32 %v877, %v951
        %v1007 = vadd.f32 %v878, %v951
        %v1008 = vadd.f32 %v879, %v951
        %v1009 = vadd.f32 %v880, %v951
        %v1010 = vadd.f32 %v881, %v951
        %v1011 = vadd.f32 %v882, %v951
        %v1012 = vadd.f32 %v883, %v951
        %v1013 = vadd.f32 %v884, %v951
        %v1014 = vadd.f32 %v885, %v951
        %v1015 = vadd.f32 %v886, %v951
        %v1016 = vadd.f32 %v887, %v951
        %v1017 = vadd.f32 %v888, %v951
        %v1018 = vadd.f32 %v889, %v951
        %v1019 = vadd.f32 %v890, %v951
        %v1020 = vadd.f32 %v891, %v951
        %v1021 = vadd.f32 %v892, %v951
        %v1022 = vadd.f32 %v893, %v951
        %v1023 = vadd.f32 %v894, %v951
        %v1024 = vadd.f32 %v895, %v951
        %v1025 = vadd.f32 %v896, %v951
        %v1026 = vadd.f32 %v897, %v951
        %v1027 = vadd.f32 %v898, %v951
        %v1028 = vadd.f32 %v899, %v951
        %v1029 = vadd.f32 %v900, %v951
        %v1030 = vadd.f32 %v901, %v951
        %v1031 = vadd.f32 %v902, %v951
        %v1032 = vadd.f32 %v903, %v951
        %v1033 = vadd.f32 %v904, %v951
        %v1034 = vadd.f32 %v905, %v951
        %v1035 = vadd.f32 %v906, %v951
        %v1036 = vadd.f32 %v907, %v951
        %v1037 = vadd.f32 %v908, %v951
        %v1038 = vadd.f32 %v909, %v951
        %v1039 = vadd.f32 %v910, %v951
        %v1040 = vadd.f32 %v911, %v951
        %v1041 = vadd.f32 %v912, %v951
        %v1042 = vadd.f32 %v913, %v951
        %v1043 = vadd.f32 %v914, %v951
        %v1044 = vadd.f32 %v915, %v951
        %v1045 = vadd.f32 %v916, %v951
        %v1046 = vadd.f32 %v917, %v951
        %v1047 = vadd.f32 %v918, %v951
        %v1048 = vadd.f32 %v919, %v951
        %v1049 = vadd.f32 %v920, %v951
        %v1050 = vadd.f32 %v921, %v951
        %v1051 = vadd.f32 %v922, %v951
        %v1052 = vadd.f32 %v923, %v951
        %v1053 = vadd.f32 %v924, %v951
        %v1054 = vadd.f32 %v925, %v951
        %v1055 = vadd.f32 %v926, %v951
        %v1056 = vadd.f32 %v927, %v951
        %v1057 = vadd.f32 %v928, %v951
        %v1058 = vadd.f32 %v929, %v951
        %v1059 = vadd.f32 %v930, %v951
        %v1060 = vadd.f32 %v931, %v951
        %v1061 = vadd.f32 %v932, %v951
        %v1062 = vadd.f32 %v933, %v951
        %v1063 = vadd.f32 %v934, %v951
        %v1064 = vadd.f32 %v935, %v951
        %v1065 = vadd.f32 %v936, %v951
        %v1066 = vadd.f32 %v937, %v951
        %v1067 = vadd.f32 %v938, %v951
        %v1068 = vadd.f32 %v939, %v951
        %v1069 = vadd.f32 %v940, %v951
        %v1070 = vadd.f32 %v941, %v951
        %v1071 = vadd.f32 %v942, %v951
        %v1072 = vadd.f32 %v943, %v951
        %v1073 = vadd.f32 %v944, %v951
        %v1074 = vadd.f32 %v945, %v951
        %v1075 = vadd.f32 %v946, %v951
        %v1076 = vadd.f32 %v947, %v951
        %v1077 = vadd.f32 %v948, %v951
        %v1078 = vadd.f32 %v949, %v951
        %v1079 = vadd.f32 %v950, %v951
        %1080 = vst [vmem:[%s173] sm:$0xff] %v952
        %1081 = vst [vmem:[%s173 + $0x8] sm:$0xff] %v953
        %1082 = vst [vmem:[%s173 + $0x10] sm:$0xff] %v954
        %1083 = vst [vmem:[%s173 + $0x18] sm:$0xff] %v955
        %1084 = vst [vmem:[%s173 + $0x20] sm:$0xff] %v956
        %1085 = vst [vmem:[%s173 + $0x28] sm:$0xff] %v957
        %1086 = vst [vmem:[%s173 + $0x30] sm:$0xff] %v958
        %1087 = vst [vmem:[%s173 + $0x38] sm:$0xff] %v959
        %1088 = vst [vmem:[%s173 + $0x40] sm:$0xff] %v960
        %1089 = vst [vmem:[%s173 + $0x48] sm:$0xff] %v961
        %1090 = vst [vmem:[%s173 + $0x50] sm:$0xff] %v962
        %1091 = vst [vmem:[%s173 + $0x58] sm:$0xff] %v963
        %1092 = vst [vmem:[%s173 + $0x60] sm:$0xff] %v964
        %1093 = vst [vmem:[%s173 + $0x68] sm:$0xff] %v965
        %1094 = vst [vmem:[%s173 + $0x70] sm:$0xff] %v966
        %1095 = vst [vmem:[%s173 + $0x78] sm:$0xff] %v967
        %1096 = vst [vmem:[%s173 + $0x80] sm:$0xff] %v968
        %1097 = vst [vmem:[%s173 + $0x88] sm:$0xff] %v969
        %1098 = vst [vmem:[%s173 + $0x90] sm:$0xff] %v970
        %1099 = vst [vmem:[%s173 + $0x98] sm:$0xff] %v971
        %1100 = vst [vmem:[%s173 + $0xa0] sm:$0xff] %v972
        %1101 = vst [vmem:[%s173 + $0xa8] sm:$0xff] %v973
        %1102 = vst [vmem:[%s173 + $0xb0] sm:$0xff] %v974
        %1103 = vst [vmem:[%s173 + $0xb8] sm:$0xff] %v975
        %1104 = vst [vmem:[%s173 + $0xc0] sm:$0xff] %v976
        %1105 = vst [vmem:[%s173 + $0xc8] sm:$0xff] %v977
        %1106 = vst [vmem:[%s173 + $0xd0] sm:$0xff] %v978
        %1107 = vst [vmem:[%s173 + $0xd8] sm:$0xff] %v979
        %1108 = vst [vmem:[%s173 + $0xe0] sm:$0xff] %v980
        %1109 = vst [vmem:[%s173 + $0xe8] sm:$0xff] %v981
        %1110 = vst [vmem:[%s173 + $0xf0] sm:$0xff] %v982
        %1111 = vst [vmem:[%s173 + $0xf8] sm:$0xff] %v983
        %1112 = vst [vmem:[%s173 + $0x100] sm:$0xff] %v984
        %1113 = vst [vmem:[%s173 + $0x108] sm:$0xff] %v985
        %1114 = vst [vmem:[%s173 + $0x110] sm:$0xff] %v986
        %1115 = vst [vmem:[%s173 + $0x118] sm:$0xff] %v987
        %1116 = vst [vmem:[%s173 + $0x120] sm:$0xff] %v988
        %1117 = vst [vmem:[%s173 + $0x128] sm:$0xff] %v989
        %1118 = vst [vmem:[%s173 + $0x130] sm:$0xff] %v990
        %1119 = vst [vmem:[%s173 + $0x138] sm:$0xff] %v991
        %1120 = vst [vmem:[%s173 + $0x140] sm:$0xff] %v992
        %1121 = vst [vmem:[%s173 + $0x148] sm:$0xff] %v993
        %1122 = vst [vmem:[%s173 + $0x150] sm:$0xff] %v994
        %1123 = vst [vmem:[%s173 + $0x158] sm:$0xff] %v995
        %1124 = vst [vmem:[%s173 + $0x160] sm:$0xff] %v996
        %1125 = vst [vmem:[%s173 + $0x168] sm:$0xff] %v997
        %1126 = vst [vmem:[%s173 + $0x170] sm:$0xff] %v998
        %1127 = vst [vmem:[%s173 + $0x178] sm:$0xff] %v999
        %1128 = vst [vmem:[%s173 + $0x180] sm:$0xff] %v1000
        %1129 = vst [vmem:[%s173 + $0x188] sm:$0xff] %v1001
        %1130 = vst [vmem:[%s173 + $0x190] sm:$0xff] %v1002
        %1131 = vst [vmem:[%s173 + $0x198] sm:$0xff] %v1003
        %1132 = vst [vmem:[%s173 + $0x1a0] sm:$0xff] %v1004
        %1133 = vst [vmem:[%s173 + $0x1a8] sm:$0xff] %v1005
        %1134 = vst [vmem:[%s173 + $0x1b0] sm:$0xff] %v1006
        %1135 = vst [vmem:[%s173 + $0x1b8] sm:$0xff] %v1007
        %1136 = vst [vmem:[%s173 + $0x1c0] sm:$0xff] %v1008
        %1137 = vst [vmem:[%s173 + $0x1c8] sm:$0xff] %v1009
        %1138 = vst [vmem:[%s173 + $0x1d0] sm:$0xff] %v1010
        %1139 = vst [vmem:[%s173 + $0x1d8] sm:$0xff] %v1011
        %1140 = vst [vmem:[%s173 + $0x1e0] sm:$0xff] %v1012
        %1141 = vst [vmem:[%s173 + $0x1e8] sm:$0xff] %v1013
        %1142 = vst [vmem:[%s173 + $0x1f0] sm:$0xff] %v1014
        %1143 = vst [vmem:[%s173 + $0x1f8] sm:$0xff] %v1015
        %1144 = vst [vmem:[%s173 + $0x200] sm:$0xff] %v1016
        %1145 = vst [vmem:[%s173 + $0x208] sm:$0xff] %v1017
        %1146 = vst [vmem:[%s173 + $0x210] sm:$0xff] %v1018
        %1147 = vst [vmem:[%s173 + $0x218] sm:$0xff] %v1019
        %1148 = vst [vmem:[%s173 + $0x220] sm:$0xff] %v1020
        %1149 = vst [vmem:[%s173 + $0x228] sm:$0xff] %v1021
        %1150 = vst [vmem:[%s173 + $0x230] sm:$0xff] %v1022
        %1151 = vst [vmem:[%s173 + $0x238] sm:$0xff] %v1023
        %1152 = vst [vmem:[%s173 + $0x240] sm:$0xff] %v1024
        %1153 = vst [vmem:[%s173 + $0x248] sm:$0xff] %v1025
        %1154 = vst [vmem:[%s173 + $0x250] sm:$0xff] %v1026
        %1155 = vst [vmem:[%s173 + $0x258] sm:$0xff] %v1027
        %1156 = vst [vmem:[%s173 + $0x260] sm:$0xff] %v1028
        %1157 = vst [vmem:[%s173 + $0x268] sm:$0xff] %v1029
        %1158 = vst [vmem:[%s173 + $0x270] sm:$0xff] %v1030
        %1159 = vst [vmem:[%s173 + $0x278] sm:$0xff] %v1031
        %1160 = vst [vmem:[%s173 + $0x280] sm:$0xff] %v1032
        %1161 = vst [vmem:[%s173 + $0x288] sm:$0xff] %v1033
        %1162 = vst [vmem:[%s173 + $0x290] sm:$0xff] %v1034
        %1163 = vst [vmem:[%s173 + $0x298] sm:$0xff] %v1035
        %1164 = vst [vmem:[%s173 + $0x2a0] sm:$0xff] %v1036
        %1165 = vst [vmem:[%s173 + $0x2a8] sm:$0xff] %v1037
        %1166 = vst [vmem:[%s173 + $0x2b0] sm:$0xff] %v1038
        %1167 = vst [vmem:[%s173 + $0x2b8] sm:$0xff] %v1039
        %1168 = vst [vmem:[%s173 + $0x2c0] sm:$0xff] %v1040
        %1169 = vst [vmem:[%s173 + $0x2c8] sm:$0xff] %v1041
        %1170 = vst [vmem:[%s173 + $0x2d0] sm:$0xff] %v1042
        %1171 = vst [vmem:[%s173 + $0x2d8] sm:$0xff] %v1043
        %1172 = vst [vmem:[%s173 + $0x2e0] sm:$0xff] %v1044
        %1173 = vst [vmem:[%s173 + $0x2e8] sm:$0xff] %v1045
        %1174 = vst [vmem:[%s173 + $0x2f0] sm:$0xff] %v1046
        %1175 = vst [vmem:[%s173 + $0x2f8] sm:$0xff] %v1047
        %1176 = vst [vmem:[%s173 + $0x300] sm:$0xff] %v1048
        %1177 = vst [vmem:[%s173 + $0x308] sm:$0xff] %v1049
        %1178 = vst [vmem:[%s173 + $0x310] sm:$0xff] %v1050
        %1179 = vst [vmem:[%s173 + $0x318] sm:$0xff] %v1051
        %1180 = vst [vmem:[%s173 + $0x320] sm:$0xff] %v1052
        %1181 = vst [vmem:[%s173 + $0x328] sm:$0xff] %v1053
        %1182 = vst [vmem:[%s173 + $0x330] sm:$0xff] %v1054
        %1183 = vst [vmem:[%s173 + $0x338] sm:$0xff] %v1055
        %1184 = vst [vmem:[%s173 + $0x340] sm:$0xff] %v1056
        %1185 = vst [vmem:[%s173 + $0x348] sm:$0xff] %v1057
        %1186 = vst [vmem:[%s173 + $0x350] sm:$0xff] %v1058
        %1187 = vst [vmem:[%s173 + $0x358] sm:$0xff] %v1059
        %1188 = vst [vmem:[%s173 + $0x360] sm:$0xff] %v1060
        %1189 = vst [vmem:[%s173 + $0x368] sm:$0xff] %v1061
        %1190 = vst [vmem:[%s173 + $0x370] sm:$0xff] %v1062
        %1191 = vst [vmem:[%s173 + $0x378] sm:$0xff] %v1063
        %1192 = vst [vmem:[%s173 + $0x380] sm:$0xff] %v1064
        %1193 = vst [vmem:[%s173 + $0x388] sm:$0xff] %v1065
        %1194 = vst [vmem:[%s173 + $0x390] sm:$0xff] %v1066
        %1195 = vst [vmem:[%s173 + $0x398] sm:$0xff] %v1067
        %1196 = vst [vmem:[%s173 + $0x3a0] sm:$0xff] %v1068
        %1197 = vst [vmem:[%s173 + $0x3a8] sm:$0xff] %v1069
        %1198 = vst [vmem:[%s173 + $0x3b0] sm:$0xff] %v1070
        %1199 = vst [vmem:[%s173 + $0x3b8] sm:$0xff] %v1071
        %1200 = vst [vmem:[%s173 + $0x3c0] sm:$0xff] %v1072
        %1201 = vst [vmem:[%s173 + $0x3c8] sm:$0xff] %v1073
        %1202 = vst [vmem:[%s173 + $0x3d0] sm:$0xff] %v1074
        %1203 = vst [vmem:[%s173 + $0x3d8] sm:$0xff] %v1075
        %1204 = vst [vmem:[%s173 + $0x3e0] sm:$0xff] %v1076
        %1205 = vst [vmem:[%s173 + $0x3e8] sm:$0xff] %v1077
        %1206 = vst [vmem:[%s173 + $0x3f0] sm:$0xff] %v1078
        %1207 = vst [vmem:[%s173 + $0x3f8] sm:$0xff] %v1079
        %s1208 = sand.u32 %s75, 1
        %s1209 = scalar_lea.sflag [#allocation4], %s1208
        %s1210 = sand.u32 %s75, 1
        %s1211 = smul.addr %s1210, 1024
        %s1212 = scalar_lea.vmem [#allocation7], %s1211
        // Predicated region
        $region37: #{tpu_custom_call.1} parent=27 // pred_check
          %p1213 = pneg %p85
        $region38: #{tpu_custom_call.1} parent=27 // pred_check_branch
          %1215 = sbr.rel (%p1213) target = $region40
        $region39: #{tpu_custom_call.1} parent=27 // pred_region
          %s1216 = smul.u32 128, %s20
          %s1218 = ssub.s32 16384, 16384
          %1219 = vsyncadd %s1209, %s1218
          %s1220 = smul.addr %s1216, 128
          %s1221 = scalar_lea.hbm %s2, %s1220
          %s1222 = sshll.u32 %s1212, 4
          %s1223 = int_to_ptr.vmem [resolvable:$true] %s1222
          %1228 = dma.vmem_to_hbm [thread:$0]  %s1223, 16384, %s1221, %s1209, 128, 128, 8
        $region40: #{tpu_custom_call.1} parent=27 // pred_fallthru
          _
      $region28: #{tpu_custom_call.1} parent=5 // pred_fallthru
        _
      %p1229 = scmp.le.s32.totalorder 2, %s15
      // Predicated region
      $region41: #{tpu_custom_call.1} parent=5 // pred_check
        %p1230 = pneg %p1229
      $region42: #{tpu_custom_call.1} parent=5 // pred_check_branch
        %1232 = sbr.rel (%p1230) target = $region44
      $region43: #{tpu_custom_call.1} parent=5 // pred_region
        %s1233 = ssub.s32 %s15, 2
        // Predicated region
        $region45: #{tpu_custom_call.1} parent=43 // pred_check
          %p1234 = pneg %p91
        $region46: #{tpu_custom_call.1} parent=43 // pred_check_branch
          %1236 = sbr.rel (%p1234) target = $region48
        $region47: #{tpu_custom_call.1} parent=43 // pred_region
          %s1237 = sand.u32 %s76, 1
          %s1238 = scalar_lea.sflag [#allocation4], %s1237
          %s1239 = sand.u32 %s76, 1
          %s1240 = smul.addr %s1239, 1024
          %s1241 = scalar_lea.vmem [#allocation7], %s1240
          %1242 = dma.done %s1238, 16384
        $region48: #{tpu_custom_call.1} parent=43 // pred_fallthru
          _
      $region44: #{tpu_custom_call.1} parent=5 // pred_fallthru
        _
    $region6: #{tpu_custom_call.1} parent=1 // loop_footer
      %s19 = sadd.s32 1, %s15
    $region7: #{tpu_custom_call.1} parent=1 // loop_footer_branch
      %14 = sbr.rel target = $region3
    $region8: #{tpu_custom_call.1} parent=1 // loop_exit
      _
    %1243 = vsyncpa [#allocation3], 1
    %s1244 = scalar_lea.sflag [#allocation3], 1
    %1245 = vsyncpa %s1244, 1
    %1246 = vsyncpa [#allocation4], 1
    %s1247 = scalar_lea.sflag [#allocation4], 1
    %1248 = vsyncpa %s1247, 1
    %1249 = vsyncpa [#allocation5], 1
    %s1250 = scalar_lea.sflag [#allocation5], 1
    %1251 = vsyncpa %s1250, 1

</llo_original>
